<compile_context>
chip_gen: v6e
topology: v6e:2x2x1
jax: 0.10.0
libtpu: 0.0.40
codegen_flags: <defaults>
</compile_context>

<pallas_src>
import jax
import jax.numpy as jnp
from jax import lax
from jax.experimental import pallas as pl
from jax.experimental.pallas import tpu as pltpu


def _conv2d_kernel(w_ref, b_ref, x_ref, o_ref):
    # w_ref: (O, KC)        conv weights, rows = output channels (sublanes)
    # b_ref: (O, 1)         bias, broadcast along the lane axis
    # x_ref: (1, KC, Pb)    per-batch im2col patches, Pb = Ho*Wo (lane-dense)
    # o_ref: (1, O, Pb)     per-batch lane-dense output slab
    acc = jnp.dot(w_ref[...], x_ref[0], preferred_element_type=jnp.float32)
    acc = acc + b_ref[...].astype(jnp.float32)
    o_ref[0] = acc.astype(o_ref.dtype)


def pad_conv2d(x_nchw, weight_oihw, bias, *, padding=1, stride=1, dilation=1,
               compute_dtype=None):
    """Equivalent of nn.Conv2d(C, O, kernel_size=KH, padding=padding)(x).

    x_nchw:      (N, C, H, W)  float32
    weight_oihw: (O, C, KH, KW)
    bias:        (O,)
    returns:     (N, O, H_out, W_out)  with stride=1, dilation=1.
    """
    if stride != 1 or dilation != 1:
        # Explicit guard instead of silently-wrong results.
        raise NotImplementedError("pad_conv2d supports stride=1, dilation=1 only")

    N, C, H, W = x_nchw.shape
    O, _, KH, KW = weight_oihw.shape
    H_out = H + 2 * padding - KH + 1
    W_out = W + 2 * padding - KW + 1
    KC = C * KH * KW            # tap order (c, kh, kw) == natural OIHW reshape
    Pb = H_out * W_out          # per-batch matmul columns (256 here, lane-dense)

    # ---- plain-JAX glue: pad + im2col, already in (N, KC, Pb) order --------
    # No transposes anywhere: the stack axis sits between C and (Ho, Wo), so
    # the reshape below is a contiguous (free) reshape and the row order
    # matches weight_oihw.reshape(O, KC).
    x_pad = jnp.pad(
        x_nchw, ((0, 0), (0, 0), (padding, padding), (padding, padding)))
    taps = [x_pad[:, :, kh:kh + H_out, kw:kw + W_out]
            for kh in range(KH) for kw in range(KW)]            # 9 x (N,C,Ho,Wo)
    patches = jnp.stack(taps, axis=2)                           # (N,C,KH*KW,Ho,Wo)
    slab = patches.reshape(N, KC, Pb)                           # free reshape

    w_mat = weight_oihw.reshape(O, KC)                          # no transpose
    b2d = bias.reshape(O, 1)

    if compute_dtype is not None:
        # bf16 MXU path for realistic sizes; accumulation/epilogue stay f32.
        slab = slab.astype(compute_dtype)
        w_mat = w_mat.astype(compute_dtype)

    # ---- Pallas call: grid over batch, weights/bias stay VMEM-resident -----
    out = pl.pallas_call(
        _conv2d_kernel,
        out_shape=jax.ShapeDtypeStruct((N, O, Pb), x_nchw.dtype),
        grid=(N,),
        in_specs=[
            pl.BlockSpec((O, KC), lambda n: (0, 0)),        # weights (resident)
            pl.BlockSpec((O, 1), lambda n: (0, 0)),         # bias (resident)
            pl.BlockSpec((1, KC, Pb), lambda n: (n, 0, 0)),  # per-batch patches
        ],
        out_specs=pl.BlockSpec((1, O, Pb), lambda n: (n, 0, 0)),
        compiler_params=pltpu.CompilerParams(
            dimension_semantics=("parallel",)),
    )(w_mat, b2d, slab)

    # TODO(synk): fully fuse im2col into the kernel (padded input -> VMEM
    # scratch slab) once the (Ho, Wo) -> Ho*Wo lane flatten is expressible
    # without a Mosaic-unsupported in-kernel reshape at W < 128; today the
    # slab is materialized by one XLA fusion (pad + concat) instead.
    # TODO(synk): for large C/H/W, add O- and P-tiles ("parallel") with KC as a
    # trailing "arbitrary" reduction axis + f32 VMEM accumulator, bf16 MXU
    # inputs, and generation-aware VMEM budgets (64 MiB ceiling on v7x,
    # 16 MiB scoped default on v5e).

    # (N, O, Ho*Wo) -> (N, O, Ho, Wo): free, contiguous reshape (no transpose).
    return out.reshape(N, O, H_out, W_out)


if __name__ == "__main__":
    key = jax.random.PRNGKey(0)
    k_x, k_w, k_b = jax.random.split(key, 3)

    # Small shapes consistent with the module: N=2, C_in=4, H=W=16,
    # Conv2d(4, 8, kernel_size=3, padding=1).
    N, C, H, W = 2, 4, 16, 16
    O, KH, KW = 8, 3, 3
    padding = 1

    x = jax.random.normal(k_x, (N, C, H, W), dtype=jnp.float32)

    # Deterministic init mimicking PyTorch's default (uniform +/- 1/sqrt(fan_in)).
    fan_in = C * KH * KW
    bound = 1.0 / (fan_in ** 0.5)
    weight = jax.random.uniform(k_w, (O, C, KH, KW), dtype=jnp.float32,
                                minval=-bound, maxval=bound)
    bias = jax.random.uniform(k_b, (O,), dtype=jnp.float32,
                              minval=-bound, maxval=bound)

    conv_fn = jax.jit(lambda xx, ww, bb: pad_conv2d(xx, ww, bb, padding=padding))
    out = conv_fn(x, weight, bias)
    out = jax.block_until_ready(out)

    # Reference check against XLA's conv.
    ref = lax.conv_general_dilated(
        x, weight, window_strides=(1, 1),
        padding=[(padding, padding), (padding, padding)],
        dimension_numbers=("NCHW", "OIHW", "NCHW"),
    ) + bias[None, :, None, None]
    assert out.shape == (N, O, H, W)
    assert jnp.allclose(out, ref, atol=1e-5, rtol=1e-5)

    print("KERNEL_OK")
</pallas_src>

<mosaic_0001>
module attributes {stable_mosaic.version = 11 : i64} {
  func.func @_conv2d_kernel(%arg0: i32, %arg1: memref<8x36xf32, #tpu.memory_space<vmem>>, %arg2: memref<8x1xf32, #tpu.memory_space<vmem>>, %arg3: memref<1x36x256xf32, #tpu.memory_space<vmem>>, %arg4: memref<1x8x256xf32, #tpu.memory_space<vmem>>) attributes {dimension_semantics = [#tpu.dimension_semantics<parallel>], iteration_bounds = array<i64: 2>, scalar_prefetch = 0 : i64, scratch_operands = 0 : i64, tpu.core_type = #tpu.core_type<tc>, window_params = [{pipeline_mode = #tpu.pipeline_mode<synchronous>, transform_indices = @transform_0, window_bounds = array<i64: 8, 36>}, {pipeline_mode = #tpu.pipeline_mode<synchronous>, transform_indices = @transform_1, window_bounds = array<i64: 8, 1>}, {transform_indices = @transform_2, window_bounds = array<i64: 1, 36, 256>}, {transform_indices = @transform_3, window_bounds = array<i64: 1, 8, 256>}]} {
    %c0 = arith.constant 0 : index
    %c0_0 = arith.constant 0 : index
    %0 = vector.load %arg1[%c0, %c0_0] : memref<8x36xf32, #tpu.memory_space<vmem>>, vector<8x36xf32>
    %c0_1 = arith.constant 0 : index
    %c0_2 = arith.constant 0 : index
    %c0_3 = arith.constant 0 : index
    %1 = vector.load %arg3[%c0_1, %c0_2, %c0_3] : memref<1x36x256xf32, #tpu.memory_space<vmem>>, vector<1x36x256xf32>
    %2 = vector.shape_cast %1 : vector<1x36x256xf32> to vector<36x256xf32>
    %cst = arith.constant dense<0.000000e+00> : vector<8x256xf32>
    %3 = tpu.matmul %0, %2, %cst {dimension_numbers = #tpu.dot_dimension_numbers<[1], [0], [0], [1], [0, 0, 1, 1], [], []>} : vector<8x36xf32>, vector<36x256xf32>, vector<8x256xf32> -> vector<8x256xf32>
    %c0_4 = arith.constant 0 : index
    %c0_5 = arith.constant 0 : index
    %4 = vector.load %arg2[%c0_4, %c0_5] : memref<8x1xf32, #tpu.memory_space<vmem>>, vector<8x1xf32>
    %5 = vector.broadcast %4 : vector<8x1xf32> to vector<8x256xf32>
    %6 = arith.addf %3, %5 : vector<8x256xf32>
    %c0_6 = arith.constant 0 : index
    %c0_7 = arith.constant 0 : index
    %c0_8 = arith.constant 0 : index
    %7 = vector.load %arg4[%c0_6, %c0_7, %c0_8] : memref<1x8x256xf32, #tpu.memory_space<vmem>>, vector<1x8x256xf32>
    %8 = vector.shape_cast %7 : vector<1x8x256xf32> to vector<8x256xf32>
    %9 = vector.shape_cast %6 : vector<8x256xf32> to vector<1x8x256xf32>
    tpu.vector_store %arg4[%c0_6, %c0_7, %c0_8], %9 {strides = array<i32>} : memref<1x8x256xf32, #tpu.memory_space<vmem>>, vector<1x8x256xf32>,
    return
  }
  func.func @transform_0(%arg0: i32) -> (i32, i32) {
    %c0_i32 = arith.constant 0 : i32
    %c0_i32_0 = arith.constant 0 : i32
    %c0_i32_1 = arith.constant 0 : i32
    return %c0_i32, %c0_i32_0 : i32, i32
  }
  func.func @transform_1(%arg0: i32) -> (i32, i32) {
    %c0_i32 = arith.constant 0 : i32
    %c0_i32_0 = arith.constant 0 : i32
    %c0_i32_1 = arith.constant 0 : i32
    return %c0_i32, %c0_i32_0 : i32, i32
  }
  func.func @transform_2(%arg0: i32) -> (i32, i32, i32) {
    %c0_i32 = arith.constant 0 : i32
    %c0_i32_0 = arith.constant 0 : i32
    %c0_i32_1 = arith.constant 0 : i32
    return %arg0, %c0_i32, %c0_i32_0 : i32, i32, i32
  }
  func.func @transform_3(%arg0: i32) -> (i32, i32, i32) {
    %c0_i32 = arith.constant 0 : i32
    %c0_i32_0 = arith.constant 0 : i32
    %c0_i32_1 = arith.constant 0 : i32
    return %arg0, %c0_i32, %c0_i32_0 : i32, i32, i32
  }
}

</mosaic_0001>

<llo_original>
// kernel: _lambda_.1
$region0: #{_lambda_.1}
  #allocation0 [shape = 'u32[]', space=smem, size = 0x4, offset = 0x4, fixed_abs, tag = 'smem constant byte address 0x4 - core index']
  #allocation1 [shape = 'u32[144,128]{1,0:T(1,128)}', space=vmem, size = 0x12000, scoped, tag = 'internal scratch']
  %s0 = inlined_call_operand.vmem [shape: f32[8,36], index: 0, kind: input, shape index: {}]
  %s1 = inlined_call_operand.vmem [shape: f32[8,1], index: 1, kind: input, shape index: {}]
  %s2 = inlined_call_operand.vmem [shape: f32[2,36,256], index: 2, kind: input, shape index: {}]
  %s3 = inlined_call_operand.vmem [shape: f32[2,8,256], index: 3, kind: output, shape index: {}]
  %s4 = sld [smem:[#allocation0]]
  $region45: #{_lambda_.1} parent=0
    _
  %s6 = ssub.s32 1, %s4
  %s7 = scalar_select 0, %s6, %s4
  loop: start=0, step=1, limit=4
  $region2: #{_lambda_.1} parent=0 // loop_pre_header
    _
  $region3: #{_lambda_.1} parent=0 // loop_header
    %s9 = sphi 0, %s13
    %p10 = scmp.ge.s32.totalorder %s9, 4
    %s17 = sphi 0, %s17
    %s19 = sphi 0, %s17
    %s20 = sphi 0, %s19
    %s34 = sphi 0, %s20
    %s38 = sphi 0, %s38
    %s40 = sphi 0, %s38
    %s41 = sphi 0, %s40
    %s55 = sphi 0, %s41
    %s61 = sphi 0, %s63
    %s64 = sphi 0, %s61
    %s65 = sphi 0, %s64
    %s81 = sphi 0, %s65
    %s87 = sphi 0, %s89
    %s90 = sphi 0, %s87
    %s91 = sphi 0, %s90
    %s107 = sphi 0, %s91
  $region4: #{_lambda_.1} parent=0 // loop_header_branch
    %12 = sbr.rel (%p10) target = $region8
  $region5: #{_lambda_.1} parent=0 // loop_body
    %s14 = ssub.s32 %s9, 1
    %s15 = ssub.s32 %s9, 2
    %s16 = sadd.s32 %s9, 1
    %s18 = sadd.s32 %s17, 1
    %p21 = scmp.eq.s32.totalorder %s9, 1
    %p22 = scmp.ne.s32.totalorder %s17, %s19
    %p23 = scmp.eq.s32.totalorder %s9, 0
    %p24 = por %p22, %p23
    %p25 = scmp.ne.s32.totalorder %s17, %s19
    %p26 = scmp.eq.s32.totalorder %s14, 1
    %p27 = por %p25, %p26
    %p28 = scmp.ne.s32.totalorder %s19, %s20
    %p29 = scmp.eq.s32.totalorder %s14, 0
    %p30 = por %p28, %p29
    %p31 = scmp.ne.s32.totalorder %s19, %s20
    %p32 = scmp.eq.s32.totalorder %s15, 1
    %p33 = por %p31, %p32
    %p35 = scmp.ne.s32.totalorder %s20, %s34
    %p36 = scmp.eq.s32.totalorder %s15, 0
    %p37 = por %p35, %p36
    %s39 = sadd.s32 %s38, 1
    %p42 = scmp.eq.s32.totalorder %s9, 1
    %p43 = scmp.ne.s32.totalorder %s38, %s40
    %p44 = scmp.eq.s32.totalorder %s9, 0
    %p45 = por %p43, %p44
    %p46 = scmp.ne.s32.totalorder %s38, %s40
    %p47 = scmp.eq.s32.totalorder %s14, 1
    %p48 = por %p46, %p47
    %p49 = scmp.ne.s32.totalorder %s40, %s41
    %p50 = scmp.eq.s32.totalorder %s14, 0
    %p51 = por %p49, %p50
    %p52 = scmp.ne.s32.totalorder %s40, %s41
    %p53 = scmp.eq.s32.totalorder %s15, 1
    %p54 = por %p52, %p53
    %p56 = scmp.ne.s32.totalorder %s41, %s55
    %p57 = scmp.eq.s32.totalorder %s15, 0
    %p58 = por %p56, %p57
    %s59 = ssub.s32 %s9, %s16
    %p60 = scmp.eq.s32.totalorder %s59, 0
    %s62 = sadd.s32 %s61, 1
    %s63 = scalar_select %p60, %s61, %s62
    %p66 = pneg %p60
    %p67 = scmp.eq.s32.totalorder %s9, 1
    %p68 = por %p66, %p67
    %p69 = scmp.ne.s32.totalorder %s61, %s64
    %p70 = scmp.eq.s32.totalorder %s9, 0
    %p71 = por %p69, %p70
    %p72 = scmp.ne.s32.totalorder %s61, %s64
    %p73 = scmp.eq.s32.totalorder %s14, 1
    %p74 = por %p72, %p73
    %p75 = scmp.ne.s32.totalorder %s64, %s65
    %p76 = scmp.eq.s32.totalorder %s14, 0
    %p77 = por %p75, %p76
    %p78 = scmp.ne.s32.totalorder %s64, %s65
    %p79 = scmp.eq.s32.totalorder %s15, 1
    %p80 = por %p78, %p79
    %p82 = scmp.ne.s32.totalorder %s65, %s81
    %p83 = scmp.eq.s32.totalorder %s15, 0
    %p84 = por %p82, %p83
    %s85 = ssub.s32 %s9, %s16
    %p86 = scmp.eq.s32.totalorder %s85, 0
    %s88 = sadd.s32 %s87, 1
    %s89 = scalar_select %p86, %s87, %s88
    %p92 = pneg %p86
    %p93 = scmp.eq.s32.totalorder %s9, 1
    %p94 = por %p92, %p93
    %p95 = scmp.ne.s32.totalorder %s87, %s90
    %p96 = scmp.eq.s32.totalorder %s9, 0
    %p97 = por %p95, %p96
    %p98 = scmp.ne.s32.totalorder %s87, %s90
    %p99 = scmp.eq.s32.totalorder %s14, 1
    %p100 = por %p98, %p99
    %p101 = scmp.ne.s32.totalorder %s90, %s91
    %p102 = scmp.eq.s32.totalorder %s14, 0
    %p103 = por %p101, %p102
    %p104 = scmp.ne.s32.totalorder %s90, %s91
    %p105 = scmp.eq.s32.totalorder %s15, 1
    %p106 = por %p104, %p105
    %p108 = scmp.ne.s32.totalorder %s91, %s107
    %p109 = scmp.eq.s32.totalorder %s15, 0
    %p110 = por %p108, %p109
    %p111 = scmp.le.s32.totalorder 1, %s9
    %p112 = scmp.lt.s32.totalorder %s9, 3
    %p113 = pnand %p111, %p112
    %p114 = pneg %p113
    // Predicated region
    $region9: #{_lambda_.1} parent=5 // pred_check
      _
    $region10: #{_lambda_.1} parent=5 // pred_check_branch
      %116 = sbr.rel (%p113) target = $region12
    $region11: #{_lambda_.1} parent=5 // pred_region
      %s117 = ssub.s32 %s9, 1
      // Predicated region
      $region13: #{_lambda_.1} parent=11 // pred_check
        %p118 = pneg %p30
      $region14: #{_lambda_.1} parent=11 // pred_check_branch
        %120 = sbr.rel (%p118) target = $region16
      $region15: #{_lambda_.1} parent=11 // pred_region
        _
      $region16: #{_lambda_.1} parent=11 // pred_fallthru
        _
      // Predicated region
      $region17: #{_lambda_.1} parent=11 // pred_check
        %p121 = pneg %p51
      $region18: #{_lambda_.1} parent=11 // pred_check_branch
        %123 = sbr.rel (%p121) target = $region20
      $region19: #{_lambda_.1} parent=11 // pred_region
        _
      $region20: #{_lambda_.1} parent=11 // pred_fallthru
        _
    $region12: #{_lambda_.1} parent=5 // pred_fallthru
      _
    %p124 = scmp.lt.s32.totalorder %s9, 2
    // Predicated region
    $region21: #{_lambda_.1} parent=5 // pred_check
      %p125 = pneg %p124
    $region22: #{_lambda_.1} parent=5 // pred_check_branch
      %127 = sbr.rel (%p125) target = $region24
    $region23: #{_lambda_.1} parent=5 // pred_region
      // Predicated region
      $region25: #{_lambda_.1} parent=23 // pred_check
        %p128 = pneg %p71
      $region26: #{_lambda_.1} parent=23 // pred_check_branch
        %130 = sbr.rel (%p128) target = $region28
      $region27: #{_lambda_.1} parent=23 // pred_region
        %p131 = scmp.lt.s32.totalorder %s9, 1
        %s132 = scalar_select %p131, %s9, 1
        %s133 = smul.addr %s132, 10
        %s134 = smul.addr %s133, 8
        %s135 = scalar_lea.vmem %s2, %s134
      $region28: #{_lambda_.1} parent=23 // pred_fallthru
        _
    $region24: #{_lambda_.1} parent=5 // pred_fallthru
      _
    %p136 = scmp.le.s32.totalorder 1, %s9
    %p137 = scmp.lt.s32.totalorder %s9, 3
    %p138 = pnand %p136, %p137
    %p139 = pneg %p138
    // Predicated region
    $region29: #{_lambda_.1} parent=5 // pred_check
      _
    $region30: #{_lambda_.1} parent=5 // pred_check_branch
      %141 = sbr.rel (%p138) target = $region32
    $region31: #{_lambda_.1} parent=5 // pred_region
      %s142 = ssub.s32 %s9, 1
      %p143 = pneg %p30
      %p144 = pneg %p27
      %p145 = pneg %p51
      %p146 = pneg %p48
      %p147 = scmp.lt.s32.totalorder %s14, 1
      %s148 = scalar_select %p147, %s14, 1
      %s149 = smul.addr %s148, 10
      %s150 = smul.addr %s149, 8
      %s151 = scalar_lea.vmem %s2, %s150
      %p152 = pneg %p77
      %p153 = pneg %p74
      %p154 = pneg %p103
      %p155 = pneg %p100
      %p156 = scmp.lt.s32.totalorder %s14, 1
      %s157 = scalar_select %p156, %s14, 1
      %s158 = smul.addr %s157, 2
      %s159 = smul.addr %s158, 8
      %s160 = scalar_lea.vmem %s3, %s159
      %p161 = scmp.lt.s32.totalorder %s14, 1
      %s162 = scalar_select %p161, %s14, 1
      %s163 = smul.addr %s162, 10
      %s164 = smul.addr %s163, 8
      %s165 = scalar_lea.vmem %s2, %s164
      %p166 = scmp.lt.s32.totalorder %s14, 1
      %s167 = scalar_select %p166, %s14, 1
      %s168 = smul.addr %s167, 2
      %s169 = smul.addr %s168, 8
      %s170 = scalar_lea.vmem %s3, %s169
      %v171 = vld [vmem:[%s0] sm:$0xff]
      %v172 = vld [vmem:[%s165] sm:$0xff]
      %v173 = vld [vmem:[%s165 + $0x8] sm:$0xff]
      %v174 = vld [vmem:[%s165 + $0x10] sm:$0xff]
      %v175 = vld [vmem:[%s165 + $0x18] sm:$0xff]
      %v176 = vld [vmem:[%s165 + $0x20] sm:$0xff]
      %v177 = vld [vmem:[%s165 + $0x28] sm:$0xff]
      %v178 = vld [vmem:[%s165 + $0x30] sm:$0xff]
      %v179 = vld [vmem:[%s165 + $0x38] sm:$0xff]
      %v180 = vld [vmem:[%s165 + $0x40] sm:$0xf]
      %v181 = vld [vmem:[%s165 + $0x48] sm:$0xf]
      %v182 = vld [vmem:[%s1] sm:$0xff]
      %184 = vset.pattern.permute.xlu0 0
      %185 = vperm.xlu0 %184, %v182
      %v186 = vpop.permute.xlu0 %185
      %vm188 = vcmask 293888
      %v190 = vsel %vm188, %v171, 0
      %vm192 = vcmask 1043456
      %v194 = vsel %vm192, %v180, 0
      %v197 = vsel %vm192, %v181, 0
      %199 = vmatprep.subr.mxu0 0.0
      %200 = vmatpush1.msra.mxu0 0.0
      %201 = vmatprep.subr.mxu0 0.0
      %202 = vmatpush1.msra.mxu0 0.0
      %203 = vmatprep.subr.mxu0 0.0
      %204 = vmatpush1.msra.mxu0 0.0
      %205 = vmatprep.subr.mxu0 0.0
      %206 = vmatpush1.msra.mxu0 0.0
      %207 = vmatprep.subr.mxu0 0.0
      %208 = vmatpush1.msra.mxu0 0.0
      %209 = vmatprep.subr.mxu0 0.0
      %210 = vmatpush1.msra.mxu0 0.0
      %211 = vmatprep.subr.mxu0 0.0
      %212 = vmatpush1.msra.mxu0 0.0
      %213 = vmatprep.subr.mxu0 0.0
      %214 = vmatpush1.msra.mxu0 0.0
      %215 = vmatprep.subr.mxu0 0.0
      %216 = vmatpush1.msra.mxu0 0.0
      %217 = vmatprep.subr.mxu0 0.0
      %218 = vmatpush1.msra.mxu0 0.0
      %219 = vmatprep.subr.mxu0 0.0
      %220 = vmatpush1.msra.mxu0 0.0
      %221 = vmatprep.subr.mxu0 %v197
      %222 = vmatpush1.msra.mxu0 %v194
      %223 = vmatprep.subr.mxu0 %v179
      %224 = vmatpush1.msra.mxu0 %v178
      %225 = vmatprep.subr.mxu0 %v177
      %226 = vmatpush1.msra.mxu0 %v176
      %227 = vmatprep.subr.mxu0 %v175
      %228 = vmatpush1.msra.mxu0 %v174
      %229 = vmatprep.subr.mxu0 %v173
      %230 = vmatpush1.msra.mxu0 %v172
      %231 = vmatprep.subr.mxu0 0.0
      %232 = vmatpush2.msra.mxu0 0.0
      %233 = vmatprep.subr.mxu0 0.0
      %234 = vmatpush2.msra.mxu0 0.0
      %235 = vmatprep.subr.mxu0 0.0
      %236 = vmatpush2.msra.mxu0 0.0
      %237 = vmatprep.subr.mxu0 0.0
      %238 = vmatpush2.msra.mxu0 0.0
      %239 = vmatprep.subr.mxu0 0.0
      %240 = vmatpush2.msra.mxu0 0.0
      %241 = vmatprep.subr.mxu0 0.0
      %242 = vmatpush2.msra.mxu0 0.0
      %243 = vmatprep.subr.mxu0 0.0
      %244 = vmatpush2.msra.mxu0 0.0
      %245 = vmatprep.subr.mxu0 0.0
      %246 = vmatpush2.msra.mxu0 0.0
      %247 = vmatprep.subr.mxu0 0.0
      %248 = vmatpush2.msra.mxu0 0.0
      %249 = vmatprep.subr.mxu0 0.0
      %250 = vmatpush2.msra.mxu0 0.0
      %251 = vmatprep.subr.mxu0 0.0
      %252 = vmatpush2.msra.mxu0 0.0
      %253 = vmatprep.subr.mxu0 0.0
      %254 = vmatpush2.msra.mxu0 0.0
      %255 = vmatprep.subr.mxu0 0.0
      %256 = vmatpush2.msra.mxu0 0.0
      %257 = vmatprep.subr.mxu0 0.0
      %258 = vmatpush2.msra.mxu0 0.0
      %259 = vmatprep.subr.mxu0 0.0
      %260 = vmatpush2.msra.mxu0 0.0
      %261 = vmatprep.subr.mxu0 0.0
      %262 = vmatpush2.msra.mxu0 0.0
      %263 = vmatprep.mubr.f32.mxu0 0.0
      %264 = vmatmul.mubr.f32.gmra.mxu0 %v190
      %v265 = vpop.f32.mrf.mxu0
      %v266 = vadd.f32 %v186, %v265
      %v267 = vpop.f32.mrf.mxu0
      %v268 = vadd.f32 %v186, %v267
      %269 = vdwg.mxu0
      %270 = vst [vmem:[%s170] sm:$0xff] %v266
      %271 = vst [vmem:[%s170 + $0x8] sm:$0xff] %v268
      %p272 = scmp.lt.s32.totalorder %s14, 1
      %s273 = scalar_select %p272, %s14, 1
      %s274 = smul.addr %s273, 2
      %s275 = smul.addr %s274, 8
      %s276 = scalar_lea.vmem %s3, %s275
      // Predicated region
      $region33: #{_lambda_.1} parent=31 // pred_check
        %p277 = pneg %p100
      $region34: #{_lambda_.1} parent=31 // pred_check_branch
        %279 = sbr.rel (%p277) target = $region36
      $region35: #{_lambda_.1} parent=31 // pred_region
        _
      $region36: #{_lambda_.1} parent=31 // pred_fallthru
        _
    $region32: #{_lambda_.1} parent=5 // pred_fallthru
      _
    %p280 = scmp.le.s32.totalorder 2, %s9
    // Predicated region
    $region37: #{_lambda_.1} parent=5 // pred_check
      %p281 = pneg %p280
    $region38: #{_lambda_.1} parent=5 // pred_check_branch
      %283 = sbr.rel (%p281) target = $region40
    $region39: #{_lambda_.1} parent=5 // pred_region
      %s284 = ssub.s32 %s9, 2
      // Predicated region
      $region41: #{_lambda_.1} parent=39 // pred_check
        %p285 = pneg %p106
      $region42: #{_lambda_.1} parent=39 // pred_check_branch
        %287 = sbr.rel (%p285) target = $region44
      $region43: #{_lambda_.1} parent=39 // pred_region
        %p288 = scmp.lt.s32.totalorder %s15, 1
        %s289 = scalar_select %p288, %s15, 1
        %s290 = smul.addr %s289, 2
        %s291 = smul.addr %s290, 8
        %s292 = scalar_lea.vmem %s3, %s291
      $region44: #{_lambda_.1} parent=39 // pred_fallthru
        _
    $region40: #{_lambda_.1} parent=5 // pred_fallthru
      _
  $region6: #{_lambda_.1} parent=0 // loop_footer
    %s13 = sadd.s32 1, %s9
  $region7: #{_lambda_.1} parent=0 // loop_footer_branch
    %8 = sbr.rel target = $region3
  $region8: #{_lambda_.1} parent=0 // loop_exit
    _

</llo_original>
